<compile_context>
chip_gen: v7x
topology: tpu7x:2x2x1
jax: 0.10.0
libtpu: 0.0.40
codegen_flags: <defaults>
</compile_context>

<pallas_src>
import jax
import jax.numpy as jnp
from jax.experimental import pallas as pl
from jax.experimental.pallas import tpu as pltpu


# ---------------------------------------------------------------------------
# Kernel
# ---------------------------------------------------------------------------
def _make_kernel(k_max, tl, pad_max, compute_dtype):
    tlp = tl + 2 * pad_max  # L-tile plus SAME-conv halo on both sides

    def kernel(x_ref, wb_ref, wbig_ref, scale_ref, shift_ref, out_ref, f_ref):
        # grid = (batch, L-tile); both axes are independent ("parallel").
        t = pl.program_id(1)
        start = pl.multiple_of(t * tl, tl)                      # tl % 128 == 0

        # ---- grouped 1x1 bottleneck conv (no bias) as ONE block-diagonal matmul
        xw = x_ref[:, pl.ds(start, tlp)].astype(compute_dtype)  # (ni, tlp)
        f_ref[...] = jnp.dot(
            wb_ref[...], xw, preferred_element_type=jnp.float32
        ).astype(compute_dtype)                                 # (nf, tlp)

        # ---- im2col slab of shifted bottleneck features:
        #      slab[s*nf + q, c] = f[q, s + c]
        slab = jnp.concatenate(
            [f_ref[:, s:s + tl] for s in range(k_max)], axis=0)  # (k_max*nf, tl)

        # ---- all branches / groups / taps fused into ONE MXU matmul; wbig rows
        #      are already in the torch view->concat(dim=2)->view channel order.
        acc = jnp.dot(wbig_ref[...], slab,
                      preferred_element_type=jnp.float32)        # (outc, tl)

        # ---- BN (eval, conv-bias folded into shift) + ReLU, f32 epilogue.
        #      DropoutTimeSeriesChannels is identity in eval mode.
        h = acc * scale_ref[...] + shift_ref[...]
        out_ref[...] = jnp.maximum(h, 0.0).astype(out_ref.dtype)

    return kernel


# ---------------------------------------------------------------------------
# Wrapper
# ---------------------------------------------------------------------------
def inception_module_forward(x, packed, *, k_list, tl=128, stride=1):
    assert stride == 1  # TODO(synk): stride > 1 not implemented
    assert tl % 128 == 0
    B, ni, L = x.shape
    wb = packed["wb_bd"]       # (nf, ni)          block-diagonal bottleneck
    wbig = packed["w_big"]     # (outc, k_max*nf)  fused branch weights
    scale = packed["scale"]    # (outc, 1) f32
    shift = packed["shift"]    # (outc, 1) f32     (conv bias folded in)
    nf = wb.shape[0]
    outc = wbig.shape[0]
    k_max = max(k_list)
    pad_max = k_max // 2
    compute_dtype = wb.dtype

    n_l = pl.cdiv(L, tl)
    l_round = n_l * tl
    lp_total = l_round + 2 * pad_max
    # SAME-conv halo (pad_max per side) + round L up to a lane-dense multiple of
    # 128; the extra columns are computed and discarded at the end.
    x_pad = jnp.pad(x, ((0, 0), (0, 0), (pad_max, pad_max + l_round - L)))

    kernel = _make_kernel(k_max, tl, pad_max, compute_dtype)
    grid_spec = pltpu.PrefetchScalarGridSpec(
        num_scalar_prefetch=0,
        grid=(B, n_l),
        in_specs=[
            # full padded row per batch element (block index only changes with b)
            pl.BlockSpec((None, ni, lp_total), lambda b, t: (b, 0, 0)),
            pl.BlockSpec(wb.shape, lambda b, t: (0, 0)),
            pl.BlockSpec(wbig.shape, lambda b, t: (0, 0)),
            pl.BlockSpec(scale.shape, lambda b, t: (0, 0)),
            pl.BlockSpec(shift.shape, lambda b, t: (0, 0)),
        ],
        out_specs=pl.BlockSpec((None, outc, tl), lambda b, t: (b, 0, t)),
        scratch_shapes=[pltpu.VMEM((nf, tl + 2 * pad_max), compute_dtype)],
    )
    out = pl.pallas_call(
        kernel,
        out_shape=jax.ShapeDtypeStruct((B, outc, l_round), jnp.float32),
        grid_spec=grid_spec,
        compiler_params=pltpu.CompilerParams(
            dimension_semantics=("parallel", "parallel")),
    )(x_pad, wb, wbig, scale, shift)
    return out[:, :, :L]


# ---------------------------------------------------------------------------
# Parameter construction (torch layouts) and packing into the fused-matmul layout
# ---------------------------------------------------------------------------
def init_params(key, ni, nf, ng, k_list):
    """Deterministic synthetic parameters in torch layout."""
    nf_g, ni_g, nk = nf // ng, ni // ng, len(k_list)
    outc = nf * nk
    keys = jax.random.split(key, 2 * nk + 6)

    wb_t = 0.2 * jax.random.normal(keys[0], (nf, ni_g, 1), jnp.float32)
    conv_w_t, conv_b_t = [], []
    for j, k in enumerate(k_list):
        conv_w_t.append(0.1 * jax.random.normal(keys[1 + 2 * j], (nf, nf_g, k), jnp.float32))
        conv_b_t.append(0.1 * jax.random.normal(keys[2 + 2 * j], (nf,), jnp.float32))
    gamma = 1.0 + 0.1 * jax.random.normal(keys[1 + 2 * nk], (outc,), jnp.float32)
    beta = 0.1 * jax.random.normal(keys[2 + 2 * nk], (outc,), jnp.float32)
    rmean = 0.1 * jax.random.normal(keys[3 + 2 * nk], (outc,), jnp.float32)
    rvar = jax.random.uniform(keys[4 + 2 * nk], (outc,), jnp.float32, 0.5, 1.5)
    eps = 1e-5
    scale = gamma / jnp.sqrt(rvar + eps)
    shift = beta - rmean * scale
    return {"wb_t": wb_t, "conv_w_t": conv_w_t, "conv_b_t": conv_b_t,
            "scale": scale, "shift": shift}


def pack_params(raw, ni, nf, ng, k_list, compute_dtype=jnp.float32):
    """Repack torch-layout weights for the fused single-matmul kernel."""
    nf_g, ni_g, nk = nf // ng, ni // ng, len(k_list)
    k_max = max(k_list)
    pad_max = k_max // 2
    outc = nf * nk

    # block-diagonal grouped 1x1 bottleneck: (nf, ni)
    wb2 = raw["wb_t"][:, :, 0]                                    # (nf, ni_g)
    wb_bd = jnp.zeros((nf, ni), jnp.float32)
    for g in range(ng):
        wb_bd = wb_bd.at[g * nf_g:(g + 1) * nf_g,
                         g * ni_g:(g + 1) * ni_g].set(wb2[g * nf_g:(g + 1) * nf_g])

    # fused branch/group/tap weights: (outc, k_max*nf); rows in the torch
    # view->concat(dim=2)->view interleaved channel order, columns indexed by
    # (shift s, bottleneck channel q).
    w_big = jnp.zeros((outc, k_max * nf), jnp.float32)
    bias_vec = jnp.zeros((outc,), jnp.float32)
    for j, k in enumerate(k_list):
        pad = k // 2
        w = raw["conv_w_t"][j]                                    # (nf, nf_g, k)
        b = raw["conv_b_t"][j]                                    # (nf,)
        for g in range(ng):
            r0 = g * (nk * nf_g) + j * nf_g
            bias_vec = bias_vec.at[r0:r0 + nf_g].set(b[g * nf_g:(g + 1) * nf_g])
            for tap in range(k):
                s = pad_max - pad + tap
                c0 = s * nf + g * nf_g
                w_big = w_big.at[r0:r0 + nf_g, c0:c0 + nf_g].set(
                    w[g * nf_g:(g + 1) * nf_g, :, tap])

    scale = raw["scale"]
    shift = raw["shift"] + bias_vec * scale      # fold conv bias into BN shift
    return {
        "wb_bd": wb_bd.astype(compute_dtype),
        "w_big": w_big.astype(compute_dtype),
        "scale": scale.reshape(outc, 1).astype(jnp.float32),
        "shift": shift.reshape(outc, 1).astype(jnp.float32),
    }


# ---------------------------------------------------------------------------
# Pure-JAX reference (matches the torch forward in eval mode)
# ---------------------------------------------------------------------------
def reference_forward(x, raw, ng, k_list, stride=1):
    B = x.shape[0]
    wb_t = raw["wb_t"]
    nf = wb_t.shape[0]
    nf_g = nf // ng
    nk = len(k_list)
    outc = nf * nk
    dn = ("NCH", "OIH", "NCH")
    f = jax.lax.conv_general_dilated(x, wb_t, (1,), ((0, 0),),
                                     dimension_numbers=dn, feature_group_count=ng)
    pieces = []
    for j, k in enumerate(k_list):
        o = jax.lax.conv_general_dilated(f, raw["conv_w_t"][j], (stride,),
                                         ((k // 2, k // 2),),
                                         dimension_numbers=dn, feature_group_count=ng)
        o = o + raw["conv_b_t"][j][None, :, None]
        pieces.append(o.reshape(B, ng, nf_g, -1))
    h0 = jnp.concatenate(pieces, axis=2).reshape(B, outc, -1)
    h1 = h0 * raw["scale"][None, :, None] + raw["shift"][None, :, None]
    return jnp.maximum(h1, 0.0)


# ---------------------------------------------------------------------------
if __name__ == "__main__":
    ni, nf, ng = 16, 32, 2
    k_list = [int(k // 2 * 2 + 1) for k in [3, 5, 7]]   # -> [3, 5, 7]
    B, L = 2, 256

    key = jax.random.PRNGKey(0)
    kx, kp = jax.random.split(key)
    x = jax.random.normal(kx, (B, ni, L), jnp.float32)
    raw = init_params(kp, ni, nf, ng, k_list)
    y_ref = reference_forward(x, raw, ng, k_list)

    # --- f32 path (portable v5e / v6e / v7x) -------------------------------
    packed = pack_params(raw, ni, nf, ng, k_list, compute_dtype=jnp.float32)
    y = jax.block_until_ready(
        inception_module_forward(x, packed, k_list=k_list, tl=128))
    assert y.shape == (B, nf * len(k_list), L)
    err = float(jnp.max(jnp.abs(y - y_ref)))
    assert jnp.allclose(y, y_ref, rtol=2e-3, atol=2e-3), err

    # --- ragged L (wrapper pads to a lane-dense multiple of 128, slices back)
    L2 = 100
    x2 = jax.random.normal(jax.random.PRNGKey(1), (B, ni, L2), jnp.float32)
    y2 = jax.block_until_ready(
        inception_module_forward(x2, packed, k_list=k_list, tl=128))
    y2_ref = reference_forward(x2, raw, ng, k_list)
    assert jnp.allclose(y2, y2_ref, rtol=2e-3, atol=2e-3), \
        float(jnp.max(jnp.abs(y2 - y2_ref)))

    # --- bf16 matmul operands (v6e/v7x MXU), f32 accumulation + f32 epilogue
    packed_bf16 = pack_params(raw, ni, nf, ng, k_list, compute_dtype=jnp.bfloat16)
    y3 = jax.block_until_ready(
        inception_module_forward(x, packed_bf16, k_list=k_list, tl=128))
    assert jnp.allclose(y3, y_ref, rtol=5e-2, atol=5e-2), \
        float(jnp.max(jnp.abs(y3 - y_ref)))

    print("KERNEL_OK")
</pallas_src>

<mosaic_0001>
module attributes {stable_mosaic.version = 11 : i64} {
  func.func @kernel(%arg0: i32, %arg1: i32, %arg2: memref<1x16x262xf32, #tpu.memory_space<vmem>>, %arg3: memref<32x16xf32, #tpu.memory_space<vmem>>, %arg4: memref<96x224xf32, #tpu.memory_space<vmem>>, %arg5: memref<96x1xf32, #tpu.memory_space<vmem>>, %arg6: memref<96x1xf32, #tpu.memory_space<vmem>>, %arg7: memref<1x96x128xf32, #tpu.memory_space<vmem>>, %arg8: memref<32x134xf32, #tpu.memory_space<vmem>>) attributes {dimension_semantics = [#tpu.dimension_semantics<parallel>, #tpu.dimension_semantics<parallel>], iteration_bounds = array<i64: 2, 2>, scalar_prefetch = 0 : i64, scratch_operands = 1 : i64, tpu.core_type = #tpu.core_type<tc>, window_params = [{transform_indices = @transform_0, window_bounds = array<i64: 1, 16, 262>}, {pipeline_mode = #tpu.pipeline_mode<synchronous>, transform_indices = @transform_1, window_bounds = array<i64: 32, 16>}, {pipeline_mode = #tpu.pipeline_mode<synchronous>, transform_indices = @transform_2, window_bounds = array<i64: 96, 224>}, {pipeline_mode = #tpu.pipeline_mode<synchronous>, transform_indices = @transform_3, window_bounds = array<i64: 96, 1>}, {pipeline_mode = #tpu.pipeline_mode<synchronous>, transform_indices = @transform_4, window_bounds = array<i64: 96, 1>}, {transform_indices = @transform_5, window_bounds = array<i64: 1, 96, 128>}]} {
    %c128_i32 = arith.constant 128 : i32
    %0 = arith.muli %arg1, %c128_i32 : i32
    %1 = tpu.assume_multiple %0, 128 : i32
    %c0 = arith.constant 0 : index
    %c0_0 = arith.constant 0 : index
    %2 = arith.index_cast %1 : i32 to index
    %3 = vector.load %arg2[%c0, %c0_0, %2] : memref<1x16x262xf32, #tpu.memory_space<vmem>>, vector<1x16x134xf32>
    %4 = vector.shape_cast %3 : vector<1x16x134xf32> to vector<16x134xf32>
    %c0_1 = arith.constant 0 : index
    %c0_2 = arith.constant 0 : index
    %5 = vector.load %arg3[%c0_1, %c0_2] : memref<32x16xf32, #tpu.memory_space<vmem>>, vector<32x16xf32>
    %cst = arith.constant dense<0.000000e+00> : vector<32x134xf32>
    %6 = tpu.matmul %5, %4, %cst {dimension_numbers = #tpu.dot_dimension_numbers<[1], [0], [0], [1], [0, 0, 1, 1], [], []>} : vector<32x16xf32>, vector<16x134xf32>, vector<32x134xf32> -> vector<32x134xf32>
    %c0_3 = arith.constant 0 : index
    %c0_4 = arith.constant 0 : index
    %7 = vector.load %arg8[%c0_3, %c0_4] : memref<32x134xf32, #tpu.memory_space<vmem>>, vector<32x134xf32>
    tpu.vector_store %arg8[%c0_3, %c0_4], %6 {strides = array<i32>} : memref<32x134xf32, #tpu.memory_space<vmem>>, vector<32x134xf32>,
    %c0_5 = arith.constant 0 : index
    %c0_6 = arith.constant 0 : index
    %8 = vector.load %arg8[%c0_5, %c0_6] : memref<32x134xf32, #tpu.memory_space<vmem>>, vector<32x128xf32>
    %c0_7 = arith.constant 0 : index
    %c1 = arith.constant 1 : index
    %9 = vector.load %arg8[%c0_7, %c1] : memref<32x134xf32, #tpu.memory_space<vmem>>, vector<32x128xf32>
    %c0_8 = arith.constant 0 : index
    %c2 = arith.constant 2 : index
    %10 = vector.load %arg8[%c0_8, %c2] : memref<32x134xf32, #tpu.memory_space<vmem>>, vector<32x128xf32>
    %c0_9 = arith.constant 0 : index
    %c3 = arith.constant 3 : index
    %11 = vector.load %arg8[%c0_9, %c3] : memref<32x134xf32, #tpu.memory_space<vmem>>, vector<32x128xf32>
    %c0_10 = arith.constant 0 : index
    %c4 = arith.constant 4 : index
    %12 = vector.load %arg8[%c0_10, %c4] : memref<32x134xf32, #tpu.memory_space<vmem>>, vector<32x128xf32>
    %c0_11 = arith.constant 0 : index
    %c5 = arith.constant 5 : index
    %13 = vector.load %arg8[%c0_11, %c5] : memref<32x134xf32, #tpu.memory_space<vmem>>, vector<32x128xf32>
    %c0_12 = arith.constant 0 : index
    %c6 = arith.constant 6 : index
    %14 = vector.load %arg8[%c0_12, %c6] : memref<32x134xf32, #tpu.memory_space<vmem>>, vector<32x128xf32>
    %15 = tpu.concatenate %8, %9, %10, %11, %12, %13, %14 in 0 : vector<32x128xf32>, vector<32x128xf32>, vector<32x128xf32>, vector<32x128xf32>, vector<32x128xf32>, vector<32x128xf32>, vector<32x128xf32> -> vector<224x128xf32>
    %c0_13 = arith.constant 0 : index
    %c0_14 = arith.constant 0 : index
    %16 = vector.load %arg4[%c0_13, %c0_14] : memref<96x224xf32, #tpu.memory_space<vmem>>, vector<96x224xf32>
    %cst_15 = arith.constant dense<0.000000e+00> : vector<96x128xf32>
    %17 = tpu.matmul %16, %15, %cst_15 {dimension_numbers = #tpu.dot_dimension_numbers<[1], [0], [0], [1], [0, 0, 1, 1], [], []>} : vector<96x224xf32>, vector<224x128xf32>, vector<96x128xf32> -> vector<96x128xf32>
    %c0_16 = arith.constant 0 : index
    %c0_17 = arith.constant 0 : index
    %18 = vector.load %arg5[%c0_16, %c0_17] : memref<96x1xf32, #tpu.memory_space<vmem>>, vector<96x1xf32>
    %19 = vector.broadcast %18 : vector<96x1xf32> to vector<96x128xf32>
    %20 = arith.mulf %17, %19 : vector<96x128xf32>
    %c0_18 = arith.constant 0 : index
    %c0_19 = arith.constant 0 : index
    %21 = vector.load %arg6[%c0_18, %c0_19] : memref<96x1xf32, #tpu.memory_space<vmem>>, vector<96x1xf32>
    %22 = vector.broadcast %21 : vector<96x1xf32> to vector<96x128xf32>
    %23 = arith.addf %20, %22 : vector<96x128xf32>
    %cst_20 = arith.constant 0.000000e+00 : f32
    %24 = vector.broadcast %cst_20 : f32 to vector<96x128xf32>
    %25 = arith.maximumf %23, %24 : vector<96x128xf32>
    %c0_21 = arith.constant 0 : index
    %c0_22 = arith.constant 0 : index
    %c0_23 = arith.constant 0 : index
    %26 = vector.load %arg7[%c0_21, %c0_22, %c0_23] : memref<1x96x128xf32, #tpu.memory_space<vmem>>, vector<1x96x128xf32>
    %27 = vector.shape_cast %26 : vector<1x96x128xf32> to vector<96x128xf32>
    %28 = vector.shape_cast %25 : vector<96x128xf32> to vector<1x96x128xf32>
    tpu.vector_store %arg7[%c0_21, %c0_22, %c0_23], %28 {strides = array<i32>} : memref<1x96x128xf32, #tpu.memory_space<vmem>>, vector<1x96x128xf32>,
    return
  }
  func.func @transform_0(%arg0: i32, %arg1: i32) -> (i32, i32, i32) {
    %c0_i32 = arith.constant 0 : i32
    %c0_i32_0 = arith.constant 0 : i32
    %c0_i32_1 = arith.constant 0 : i32
    return %arg0, %c0_i32, %c0_i32_0 : i32, i32, i32
  }
  func.func @transform_1(%arg0: i32, %arg1: i32) -> (i32, i32) {
    %c0_i32 = arith.constant 0 : i32
    %c0_i32_0 = arith.constant 0 : i32
    %c0_i32_1 = arith.constant 0 : i32
    return %c0_i32, %c0_i32_0 : i32, i32
  }
  func.func @transform_2(%arg0: i32, %arg1: i32) -> (i32, i32) {
    %c0_i32 = arith.constant 0 : i32
    %c0_i32_0 = arith.constant 0 : i32
    %c0_i32_1 = arith.constant 0 : i32
    return %c0_i32, %c0_i32_0 : i32, i32
  }
  func.func @transform_3(%arg0: i32, %arg1: i32) -> (i32, i32) {
    %c0_i32 = arith.constant 0 : i32
    %c0_i32_0 = arith.constant 0 : i32
    %c0_i32_1 = arith.constant 0 : i32
    return %c0_i32, %c0_i32_0 : i32, i32
  }
  func.func @transform_4(%arg0: i32, %arg1: i32) -> (i32, i32) {
    %c0_i32 = arith.constant 0 : i32
    %c0_i32_0 = arith.constant 0 : i32
    %c0_i32_1 = arith.constant 0 : i32
    return %c0_i32, %c0_i32_0 : i32, i32
  }
  func.func @transform_5(%arg0: i32, %arg1: i32) -> (i32, i32, i32) {
    %c0_i32 = arith.constant 0 : i32
    %c0_i32_0 = arith.constant 0 : i32
    return %arg0, %c0_i32, %arg1 : i32, i32, i32
  }
}

</mosaic_0001>

<llo_original>
// kernel: tpu_custom_call.1
$region0: #{tpu_custom_call.1}
  #allocation0 [shape = 'u32[]', space=smem, size = 0x4, offset = 0x4, fixed_abs, tag = 'smem constant byte address 0x4 - core index']
  #allocation1 [shape = 'u32[144,128]{1,0:T(1,128)}', space=vmem, size = 0x12000, scoped, tag = 'internal scratch']
  #allocation2 [shape = 'f32[32,134]{1,0:T(8,128)}', space=vmem, size = 0x8000, scoped, tag = 'scratch operand']
  %s0 = inlined_call_operand.hbm [shape: f32[2,16,262], index: 0, kind: input, shape index: {}]
  %s1 = inlined_call_operand.vmem [shape: f32[32,16], index: 1, kind: input, shape index: {}]
  %s2 = inlined_call_operand.vmem [shape: f32[96,224], index: 2, kind: input, shape index: {}]
  %s3 = inlined_call_operand.vmem [shape: f32[96,1], index: 3, kind: input, shape index: {}]
  %s4 = inlined_call_operand.vmem [shape: f32[96,1], index: 4, kind: input, shape index: {}]
  %s5 = inlined_call_operand.hbm [shape: f32[2,96,256], index: 5, kind: output, shape index: {}]
  %s6 = sld [smem:[#allocation0]]
  $region57: #{tpu_custom_call.1} parent=0
    _
  %s8 = ssub.s32 1, %s6
  %s9 = scalar_select 0, %s8, %s6
  $region1: #{tpu_custom_call.1} parent=0
    #allocation3 [shape = 'u8[49152]{0}', space=vmem, size = 0xc000, scoped, tag = 'input window, operand 0']
    #allocation4 [shape = 's32[2]{0}', space=sflag, size = 0x8, scoped, tag = 'scoped memory for tpu_custom_call.1']
    #allocation5 [shape = 's32[2]{0}', space=sflag, size = 0x8, scoped, tag = 'scoped memory for tpu_custom_call.1']
    #allocation6 [shape = 'u8[98304]{0}', space=vmem, size = 0x18000, scoped, tag = 'output window, operand 0']
    %10 = vsyncpa [#allocation4], 0
    %s11 = scalar_lea.sflag [#allocation4], 1
    %12 = vsyncpa %s11, 0
    %13 = vsyncpa [#allocation5], 0
    %s14 = scalar_lea.sflag [#allocation5], 1
    %15 = vsyncpa %s14, 0
    loop: start=0, step=1, limit=6
    $region2: #{tpu_custom_call.1} parent=1 // loop_pre_header
      _
    $region3: #{tpu_custom_call.1} parent=1 // loop_header
      %s17 = sphi 0, %s21
      %p18 = scmp.ge.s32.totalorder %s17, 6
      %s24 = sphi 0, %s36
      %s25 = sphi 0, %s32
      %s26 = sphi 0, %s24
      %s27 = sphi 0, %s25
      %s28 = sphi 0, %s26
      %s29 = sphi 0, %s27
      %s39 = sphi 0, %s41
      %s42 = sphi 0, %s39
      %s43 = sphi 0, %s42
      %s59 = sphi 0, %s43
      %s63 = sphi 0, %s63
      %s65 = sphi 0, %s63
      %s66 = sphi 0, %s65
      %s80 = sphi 0, %s66
      %s84 = sphi 0, %s84
      %s86 = sphi 0, %s84
      %s87 = sphi 0, %s86
      %s101 = sphi 0, %s87
      %s105 = sphi 0, %s105
      %s107 = sphi 0, %s105
      %s108 = sphi 0, %s107
      %s122 = sphi 0, %s108
      %s126 = sphi 0, %s126
      %s128 = sphi 0, %s126
      %s129 = sphi 0, %s128
      %s143 = sphi 0, %s129
      %s151 = sphi 0, %s153
      %s154 = sphi 0, %s151
      %s155 = sphi 0, %s154
      %s171 = sphi 0, %s155
    $region4: #{tpu_custom_call.1} parent=1 // loop_header_branch
      %20 = sbr.rel (%p18) target = $region8
    $region5: #{tpu_custom_call.1} parent=1 // loop_body
      %s22 = ssub.s32 %s17, 1
      %s23 = ssub.s32 %s17, 2
      %s30 = sadd.s32 1, %s25
      %p31 = scmp.ge.s32.totalorder %s30, 2
      %s32 = scalar_select %p31, 0, %s30
      %s33 = sadd.s32 1, %s24
      %s34 = scalar_select %p31, %s33, %s24
      %p35 = scmp.ge.s32.totalorder %s34, 2
      %s36 = scalar_select %p35, 0, %s34
      %s37 = ssub.s32 %s24, %s36
      %p38 = scmp.eq.s32.totalorder %s37, 0
      %s40 = sadd.s32 %s39, 1
      %s41 = scalar_select %p38, %s39, %s40
      %p44 = pneg %p38
      %p45 = scmp.eq.s32.totalorder %s17, 3
      %p46 = por %p44, %p45
      %p47 = scmp.ne.s32.totalorder %s39, %s42
      %p48 = scmp.eq.s32.totalorder %s17, 0
      %p49 = por %p47, %p48
      %p50 = scmp.ne.s32.totalorder %s39, %s42
      %p51 = scmp.eq.s32.totalorder %s22, 3
      %p52 = por %p50, %p51
      %p53 = scmp.ne.s32.totalorder %s42, %s43
      %p54 = scmp.eq.s32.totalorder %s22, 0
      %p55 = por %p53, %p54
      %p56 = scmp.ne.s32.totalorder %s42, %s43
      %p57 = scmp.eq.s32.totalorder %s23, 3
      %p58 = por %p56, %p57
      %p60 = scmp.ne.s32.totalorder %s43, %s59
      %p61 = scmp.eq.s32.totalorder %s23, 0
      %p62 = por %p60, %p61
      %s64 = sadd.s32 %s63, 1
      %p67 = scmp.eq.s32.totalorder %s17, 3
      %p68 = scmp.ne.s32.totalorder %s63, %s65
      %p69 = scmp.eq.s32.totalorder %s17, 0
      %p70 = por %p68, %p69
      %p71 = scmp.ne.s32.totalorder %s63, %s65
      %p72 = scmp.eq.s32.totalorder %s22, 3
      %p73 = por %p71, %p72
      %p74 = scmp.ne.s32.totalorder %s65, %s66
      %p75 = scmp.eq.s32.totalorder %s22, 0
      %p76 = por %p74, %p75
      %p77 = scmp.ne.s32.totalorder %s65, %s66
      %p78 = scmp.eq.s32.totalorder %s23, 3
      %p79 = por %p77, %p78
      %p81 = scmp.ne.s32.totalorder %s66, %s80
      %p82 = scmp.eq.s32.totalorder %s23, 0
      %p83 = por %p81, %p82
      %s85 = sadd.s32 %s84, 1
      %p88 = scmp.eq.s32.totalorder %s17, 3
      %p89 = scmp.ne.s32.totalorder %s84, %s86
      %p90 = scmp.eq.s32.totalorder %s17, 0
      %p91 = por %p89, %p90
      %p92 = scmp.ne.s32.totalorder %s84, %s86
      %p93 = scmp.eq.s32.totalorder %s22, 3
      %p94 = por %p92, %p93
      %p95 = scmp.ne.s32.totalorder %s86, %s87
      %p96 = scmp.eq.s32.totalorder %s22, 0
      %p97 = por %p95, %p96
      %p98 = scmp.ne.s32.totalorder %s86, %s87
      %p99 = scmp.eq.s32.totalorder %s23, 3
      %p100 = por %p98, %p99
      %p102 = scmp.ne.s32.totalorder %s87, %s101
      %p103 = scmp.eq.s32.totalorder %s23, 0
      %p104 = por %p102, %p103
      %s106 = sadd.s32 %s105, 1
      %p109 = scmp.eq.s32.totalorder %s17, 3
      %p110 = scmp.ne.s32.totalorder %s105, %s107
      %p111 = scmp.eq.s32.totalorder %s17, 0
      %p112 = por %p110, %p111
      %p113 = scmp.ne.s32.totalorder %s105, %s107
      %p114 = scmp.eq.s32.totalorder %s22, 3
      %p115 = por %p113, %p114
      %p116 = scmp.ne.s32.totalorder %s107, %s108
      %p117 = scmp.eq.s32.totalorder %s22, 0
      %p118 = por %p116, %p117
      %p119 = scmp.ne.s32.totalorder %s107, %s108
      %p120 = scmp.eq.s32.totalorder %s23, 3
      %p121 = por %p119, %p120
      %p123 = scmp.ne.s32.totalorder %s108, %s122
      %p124 = scmp.eq.s32.totalorder %s23, 0
      %p125 = por %p123, %p124
      %s127 = sadd.s32 %s126, 1
      %p130 = scmp.eq.s32.totalorder %s17, 3
      %p131 = scmp.ne.s32.totalorder %s126, %s128
      %p132 = scmp.eq.s32.totalorder %s17, 0
      %p133 = por %p131, %p132
      %p134 = scmp.ne.s32.totalorder %s126, %s128
      %p135 = scmp.eq.s32.totalorder %s22, 3
      %p136 = por %p134, %p135
      %p137 = scmp.ne.s32.totalorder %s128, %s129
      %p138 = scmp.eq.s32.totalorder %s22, 0
      %p139 = por %p137, %p138
      %p140 = scmp.ne.s32.totalorder %s128, %s129
      %p141 = scmp.eq.s32.totalorder %s23, 3
      %p142 = por %p140, %p141
      %p144 = scmp.ne.s32.totalorder %s129, %s143
      %p145 = scmp.eq.s32.totalorder %s23, 0
      %p146 = por %p144, %p145
      %s147 = ssub.s32 %s24, %s36
      %s148 = ssub.s32 %s25, %s32
      %s149 = sor.u32 %s147, %s148
      %p150 = scmp.eq.s32.totalorder %s149, 0
      %s152 = sadd.s32 %s151, 1
      %s153 = scalar_select %p150, %s151, %s152
      %p156 = pneg %p150
      %p157 = scmp.eq.s32.totalorder %s17, 3
      %p158 = por %p156, %p157
      %p159 = scmp.ne.s32.totalorder %s151, %s154
      %p160 = scmp.eq.s32.totalorder %s17, 0
      %p161 = por %p159, %p160
      %p162 = scmp.ne.s32.totalorder %s151, %s154
      %p163 = scmp.eq.s32.totalorder %s22, 3
      %p164 = por %p162, %p163
      %p165 = scmp.ne.s32.totalorder %s154, %s155
      %p166 = scmp.eq.s32.totalorder %s22, 0
      %p167 = por %p165, %p166
      %p168 = scmp.ne.s32.totalorder %s154, %s155
      %p169 = scmp.eq.s32.totalorder %s23, 3
      %p170 = por %p168, %p169
      %p172 = scmp.ne.s32.totalorder %s155, %s171
      %p173 = scmp.eq.s32.totalorder %s23, 0
      %p174 = por %p172, %p173
      %p175 = scmp.le.s32.totalorder 1, %s17
      %p176 = scmp.lt.s32.totalorder %s17, 5
      %p177 = pnand %p175, %p176
      %p178 = pneg %p177
      // Predicated region
      $region9: #{tpu_custom_call.1} parent=5 // pred_check
        _
      $region10: #{tpu_custom_call.1} parent=5 // pred_check_branch
        %180 = sbr.rel (%p177) target = $region12
      $region11: #{tpu_custom_call.1} parent=5 // pred_region
        %s181 = ssub.s32 %s17, 1
        // Predicated region
        $region13: #{tpu_custom_call.1} parent=11 // pred_check
          %p182 = pneg %p76
        $region14: #{tpu_custom_call.1} parent=11 // pred_check_branch
          %184 = sbr.rel (%p182) target = $region16
        $region15: #{tpu_custom_call.1} parent=11 // pred_region
          _
        $region16: #{tpu_custom_call.1} parent=11 // pred_fallthru
          _
        // Predicated region
        $region17: #{tpu_custom_call.1} parent=11 // pred_check
          %p185 = pneg %p97
        $region18: #{tpu_custom_call.1} parent=11 // pred_check_branch
          %187 = sbr.rel (%p185) target = $region20
        $region19: #{tpu_custom_call.1} parent=11 // pred_region
          _
        $region20: #{tpu_custom_call.1} parent=11 // pred_fallthru
          _
        // Predicated region
        $region21: #{tpu_custom_call.1} parent=11 // pred_check
          %p188 = pneg %p118
        $region22: #{tpu_custom_call.1} parent=11 // pred_check_branch
          %190 = sbr.rel (%p188) target = $region24
        $region23: #{tpu_custom_call.1} parent=11 // pred_region
          _
        $region24: #{tpu_custom_call.1} parent=11 // pred_fallthru
          _
        // Predicated region
        $region25: #{tpu_custom_call.1} parent=11 // pred_check
          %p191 = pneg %p139
        $region26: #{tpu_custom_call.1} parent=11 // pred_check_branch
          %193 = sbr.rel (%p191) target = $region28
        $region27: #{tpu_custom_call.1} parent=11 // pred_region
          _
        $region28: #{tpu_custom_call.1} parent=11 // pred_fallthru
          _
      $region12: #{tpu_custom_call.1} parent=5 // pred_fallthru
        _
      %p194 = scmp.lt.s32.totalorder %s17, 4
      // Predicated region
      $region29: #{tpu_custom_call.1} parent=5 // pred_check
        %p195 = pneg %p194
      $region30: #{tpu_custom_call.1} parent=5 // pred_check_branch
        %197 = sbr.rel (%p195) target = $region32
      $region31: #{tpu_custom_call.1} parent=5 // pred_region
        // Predicated region
        $region33: #{tpu_custom_call.1} parent=31 // pred_check
          %p198 = pneg %p49
        $region34: #{tpu_custom_call.1} parent=31 // pred_check_branch
          %200 = sbr.rel (%p198) target = $region36
        $region35: #{tpu_custom_call.1} parent=31 // pred_region
          %s201 = sand.u32 %s39, 1
          %s202 = scalar_lea.sflag [#allocation4], %s201
          %s203 = sand.u32 %s39, 1
          %s204 = smul.addr %s203, 48
          %s205 = scalar_lea.vmem [#allocation3], %s204
          %s207 = ssub.s32 768, 768
          %208 = vsyncadd %s202, %s207
          %s209 = smul.addr %s24, 6
          %s210 = smul.addr %s209, 128
          %s211 = scalar_lea.hbm %s0, %s210
          %s212 = sshll.u32 %s205, 4
          %s213 = int_to_ptr.vmem [resolvable:$true] %s212
          %218 = dma.hbm_to_vmem [thread:$0]  %s211, 768, %s213, %s202, 384, 384, 24
        $region36: #{tpu_custom_call.1} parent=31 // pred_fallthru
          _
      $region32: #{tpu_custom_call.1} parent=5 // pred_fallthru
        _
      %p219 = scmp.le.s32.totalorder 1, %s17
      %p220 = scmp.lt.s32.totalorder %s17, 5
      %p221 = pnand %p219, %p220
      %p222 = pneg %p221
      // Predicated region
      $region37: #{tpu_custom_call.1} parent=5 // pred_check
        _
      $region38: #{tpu_custom_call.1} parent=5 // pred_check_branch
        %224 = sbr.rel (%p221) target = $region40
      $region39: #{tpu_custom_call.1} parent=5 // pred_region
        %s225 = ssub.s32 %s17, 1
        %s226 = sand.u32 %s42, 1
        %s227 = scalar_lea.sflag [#allocation4], %s226
        %s228 = sand.u32 %s42, 1
        %s229 = smul.addr %s228, 48
        %s230 = scalar_lea.vmem [#allocation3], %s229
        // Predicated region
        $region41: #{tpu_custom_call.1} parent=39 // pred_check
          %p231 = pneg %p55
        $region42: #{tpu_custom_call.1} parent=39 // pred_check_branch
          %233 = sbr.rel (%p231) target = $region44
        $region43: #{tpu_custom_call.1} parent=39 // pred_region
          %234 = dma.done %s227, 768
        $region44: #{tpu_custom_call.1} parent=39 // pred_fallthru
          _
        %s235 = sand.u32 %s42, 1
        %s236 = scalar_lea.sflag [#allocation4], %s235
        %s237 = sand.u32 %s42, 1
        %s238 = smul.addr %s237, 48
        %s239 = scalar_lea.vmem [#allocation3], %s238
        %p240 = pneg %p55
        %p241 = pneg %p52
        %p242 = pneg %p76
        %p243 = pneg %p73
        %p244 = pneg %p97
        %p245 = pneg %p94
        %p246 = pneg %p118
        %p247 = pneg %p115
        %p248 = pneg %p139
        %p249 = pneg %p136
        %p250 = pneg %p167
        %p251 = pneg %p164
        %s252 = sand.u32 %s154, 1
        %s253 = scalar_lea.sflag [#allocation5], %s252
        %s254 = sand.u32 %s154, 1
        %s255 = smul.addr %s254, 96
        %s256 = scalar_lea.vmem [#allocation6], %s255
        %s257 = smul.u32 %s27, 128
        %s258 = sshra.s32 %s257, 7
        %s259 = sand.u32 %s257, 127
        %s260 = smul.addr %s258, 8
        %s261 = scalar_lea.vmem %s230, %s260 [#allocation3]
        %v262 = vld [vmem:[%s261] sm:$0xff]
        %v263 = vld [vmem:[%s261 + $0x8] sm:$0xff]
        %v264 = vld [vmem:[%s261 + $0x18] sm:$0xff]
        %v265 = vld [vmem:[%s261 + $0x20] sm:$0xff]
        %v266 = vld [vmem:[%s1] sm:$0xff]
        %v267 = vld [vmem:[%s1 + $0x8] sm:$0xff]
        %v268 = vld [vmem:[%s1 + $0x10] sm:$0xff]
        %v269 = vld [vmem:[%s1 + $0x18] sm:$0xff]
        %vm270 = vcmask 130048
        %v272 = vsel %vm270, %v266, 0
        %v275 = vsel %vm270, %v267, 0
        %v278 = vsel %vm270, %v268, 0
        %v281 = vsel %vm270, %v269, 0
        %283 = vmatprep.subr.mxu0 %v263
        %284 = vmatpush1.msra.mxu0 %v262
        %285 = vmatprep.subr.mxu0 %v265
        %286 = vmatpush1.msra.mxu0 %v264
        %287 = vmatprep.subr.mxu0 0.0
        %288 = vmatpush1.msra.mxu0 0.0
        %289 = vmatprep.subr.mxu0 0.0
        %290 = vmatpush1.msra.mxu0 0.0
        %291 = vmatprep.subr.mxu0 0.0
        %292 = vmatpush1.msra.mxu0 0.0
        %293 = vmatprep.subr.mxu0 0.0
        %294 = vmatpush1.msra.mxu0 0.0
        %295 = vmatprep.subr.mxu0 0.0
        %296 = vmatpush1.msra.mxu0 0.0
        %297 = vmatprep.subr.mxu0 0.0
        %298 = vmatpush1.msra.mxu0 0.0
        %299 = vmatprep.subr.mxu0 0.0
        %300 = vmatpush1.msra.mxu0 0.0
        %301 = vmatprep.subr.mxu0 0.0
        %302 = vmatpush1.msra.mxu0 0.0
        %303 = vmatprep.subr.mxu0 0.0
        %304 = vmatpush1.msra.mxu0 0.0
        %305 = vmatprep.subr.mxu0 0.0
        %306 = vmatpush1.msra.mxu0 0.0
        %307 = vmatprep.subr.mxu0 0.0
        %308 = vmatpush1.msra.mxu0 0.0
        %309 = vmatprep.subr.mxu0 0.0
        %310 = vmatpush1.msra.mxu0 0.0
        %311 = vmatprep.subr.mxu0 0.0
        %312 = vmatpush1.msra.mxu0 0.0
        %313 = vmatprep.subr.mxu0 0.0
        %314 = vmatpush1.msra.mxu0 0.0
        %315 = vmatprep.subr.mxu0 0.0
        %316 = vmatpush1.msra.mxu0 0.0
        %317 = vmatprep.subr.mxu0 0.0
        %318 = vmatpush1.msra.mxu0 0.0
        %319 = vmatprep.subr.mxu0 0.0
        %320 = vmatpush1.msra.mxu0 0.0
        %321 = vmatprep.subr.mxu0 0.0
        %322 = vmatpush1.msra.mxu0 0.0
        %323 = vmatprep.subr.mxu0 0.0
        %324 = vmatpush1.msra.mxu0 0.0
        %325 = vmatprep.subr.mxu0 0.0
        %326 = vmatpush1.msra.mxu0 0.0
        %327 = vmatprep.subr.mxu0 0.0
        %328 = vmatpush1.msra.mxu0 0.0
        %329 = vmatprep.subr.mxu0 0.0
        %330 = vmatpush1.msra.mxu0 0.0
        %331 = vmatprep.subr.mxu0 0.0
        %332 = vmatpush1.msra.mxu0 0.0
        %333 = vmatprep.subr.mxu0 0.0
        %334 = vmatpush1.msra.mxu0 0.0
        %335 = vmatprep.subr.mxu0 0.0
        %336 = vmatpush1.msra.mxu0 0.0
        %337 = vmatprep.subr.mxu0 0.0
        %338 = vmatpush1.msra.mxu0 0.0
        %339 = vmatprep.subr.mxu0 0.0
        %340 = vmatpush1.msra.mxu0 0.0
        %341 = vmatprep.subr.mxu0 0.0
        %342 = vmatpush1.msra.mxu0 0.0
        %343 = vmatprep.subr.mxu0 0.0
        %344 = vmatpush1.msra.mxu0 0.0
        %345 = vmatprep.subr.mxu0 0.0
        %346 = vmatpush1.msra.mxu0 0.0
        %347 = vmatprep.mubr.f32.mxu0 0.0
        %348 = vmatmul.mubr.f32.gmra.mrb[0].mxu0 %v272
        %v349 = vpop.f32.mrb[0].mxu0
        %v350 = vadd.f32 0.0, %v349
        %v351 = vpop.f32.mrb[0].mxu0
        %v352 = vadd.f32 0.0, %v351
        %353 = vmatprep.mubr.f32.mxu0 0.0
        %354 = vmatmul.mubr.f32.gmra.mrb[0].mxu0 %v275
        %v355 = vpop.f32.mrb[0].mxu0
        %v356 = vadd.f32 0.0, %v355
        %v357 = vpop.f32.mrb[0].mxu0
        %v358 = vadd.f32 0.0, %v357
        %359 = vmatprep.mubr.f32.mxu0 0.0
        %360 = vmatmul.mubr.f32.gmra.mrb[0].mxu0 %v278
        %v361 = vpop.f32.mrb[0].mxu0
        %v362 = vadd.f32 0.0, %v361
        %v363 = vpop.f32.mrb[0].mxu0
        %v364 = vadd.f32 0.0, %v363
        %365 = vmatprep.mubr.f32.mxu0 0.0
        %366 = vmatmul.mubr.f32.gmra.mrb[0].mxu0 %v281
        %v367 = vpop.f32.mrb[0].mxu0
        %v368 = vadd.f32 0.0, %v367
        %v369 = vpop.f32.mrb[0].mxu0
        %v370 = vadd.f32 0.0, %v369
        %371 = vdwg.mxu0
        %372 = vst [vmem:[#allocation2] sm:$0xff] %v350
        %vm373 = vcmask 48128
        %374 = vst.msk [vmem:[#allocation2 + $0x8] sm:$0xff] %vm373, %v352
        %375 = vst [vmem:[#allocation2 + $0x10] sm:$0xff] %v356
        %376 = vst.msk [vmem:[#allocation2 + $0x18] sm:$0xff] %vm373, %v358
        %377 = vst [vmem:[#allocation2 + $0x20] sm:$0xff] %v362
        %378 = vst.msk [vmem:[#allocation2 + $0x28] sm:$0xff] %vm373, %v364
        %379 = vst [vmem:[#allocation2 + $0x30] sm:$0xff] %v368
        %380 = vst.msk [vmem:[#allocation2 + $0x38] sm:$0xff] %vm373, %v370
        %v381 = vld [vmem:[#allocation2] sm:$0xff]
        %v382 = vld [vmem:[#allocation2 + $0x10] sm:$0xff]
        %v383 = vld [vmem:[#allocation2 + $0x20] sm:$0xff]
        %v384 = vld [vmem:[#allocation2 + $0x30] sm:$0xff]
        %v385 = vld [vmem:[#allocation2 + $0x8] sm:$0xff]
        %v386 = vld [vmem:[#allocation2 + $0x18] sm:$0xff]
        %v387 = vld [vmem:[#allocation2 + $0x28] sm:$0xff]
        %v388 = vld [vmem:[#allocation2 + $0x38] sm:$0xff]
        %397 = vrot.lane.b32.xlu0 %v381, 127
        %v398 = vpop.permute.xlu0 %397
        %399 = vrot.lane.b32.xlu0 %v385, 127
        %v400 = vpop.permute.xlu0 %399
        %401 = vrot.lane.b32.xlu0 %v382, 127
        %v402 = vpop.permute.xlu0 %401
        %403 = vrot.lane.b32.xlu0 %v386, 127
        %v404 = vpop.permute.xlu0 %403
        %405 = vrot.lane.b32.xlu0 %v383, 127
        %v406 = vpop.permute.xlu0 %405
        %407 = vrot.lane.b32.xlu0 %v387, 127
        %v408 = vpop.permute.xlu0 %407
        %409 = vrot.lane.b32.xlu0 %v384, 127
        %v410 = vpop.permute.xlu0 %409
        %411 = vrot.lane.b32.xlu0 %v388, 127
        %v412 = vpop.permute.xlu0 %411
        %vm413 = vcmask 1039360
        %v414 = vsel %vm413, %v398, %v400
        %v415 = vsel %vm413, %v402, %v404
        %v416 = vsel %vm413, %v406, %v408
        %v417 = vsel %vm413, %v410, %v412
        %422 = vrot.lane.b32.xlu0 %v381, 126
        %v423 = vpop.permute.xlu0 %422
        %424 = vrot.lane.b32.xlu0 %v385, 126
        %v425 = vpop.permute.xlu0 %424
        %426 = vrot.lane.b32.xlu0 %v382, 126
        %v427 = vpop.permute.xlu0 %426
        %428 = vrot.lane.b32.xlu0 %v386, 126
        %v429 = vpop.permute.xlu0 %428
        %430 = vrot.lane.b32.xlu0 %v383, 126
        %v431 = vpop.permute.xlu0 %430
        %432 = vrot.lane.b32.xlu0 %v387, 126
        %v433 = vpop.permute.xlu0 %432
        %434 = vrot.lane.b32.xlu0 %v384, 126
        %v435 = vpop.permute.xlu0 %434
        %436 = vrot.lane.b32.xlu0 %v388, 126
        %v437 = vpop.permute.xlu0 %436
        %vm438 = vcmask 1031168
        %v439 = vsel %vm438, %v423, %v425
        %v440 = vsel %vm438, %v427, %v429
        %v441 = vsel %vm438, %v431, %v433
        %v442 = vsel %vm438, %v435, %v437
        %447 = vrot.lane.b32.xlu0 %v381, 125
        %v448 = vpop.permute.xlu0 %447
        %449 = vrot.lane.b32.xlu0 %v385, 125
        %v450 = vpop.permute.xlu0 %449
        %451 = vrot.lane.b32.xlu0 %v382, 125
        %v452 = vpop.permute.xlu0 %451
        %453 = vrot.lane.b32.xlu0 %v386, 125
        %v454 = vpop.permute.xlu0 %453
        %455 = vrot.lane.b32.xlu0 %v383, 125
        %v456 = vpop.permute.xlu0 %455
        %457 = vrot.lane.b32.xlu0 %v387, 125
        %v458 = vpop.permute.xlu0 %457
        %459 = vrot.lane.b32.xlu0 %v384, 125
        %v460 = vpop.permute.xlu0 %459
        %461 = vrot.lane.b32.xlu0 %v388, 125
        %v462 = vpop.permute.xlu0 %461
        %vm463 = vcmask 1022976
        %v464 = vsel %vm463, %v448, %v450
        %v465 = vsel %vm463, %v452, %v454
        %v466 = vsel %vm463, %v456, %v458
        %v467 = vsel %vm463, %v460, %v462
        %472 = vrot.lane.b32.xlu0 %v381, 124
        %v473 = vpop.permute.xlu0 %472
        %474 = vrot.lane.b32.xlu0 %v385, 124
        %v475 = vpop.permute.xlu0 %474
        %476 = vrot.lane.b32.xlu0 %v382, 124
        %v477 = vpop.permute.xlu0 %476
        %478 = vrot.lane.b32.xlu0 %v386, 124
        %v479 = vpop.permute.xlu0 %478
        %480 = vrot.lane.b32.xlu0 %v383, 124
        %v481 = vpop.permute.xlu0 %480
        %482 = vrot.lane.b32.xlu0 %v387, 124
        %v483 = vpop.permute.xlu0 %482
        %484 = vrot.lane.b32.xlu0 %v384, 124
        %v485 = vpop.permute.xlu0 %484
        %486 = vrot.lane.b32.xlu0 %v388, 124
        %v487 = vpop.permute.xlu0 %486
        %vm488 = vcmask 1014784
        %v489 = vsel %vm488, %v473, %v475
        %v490 = vsel %vm488, %v477, %v479
        %v491 = vsel %vm488, %v481, %v483
        %v492 = vsel %vm488, %v485, %v487
        %497 = vrot.lane.b32.xlu0 %v381, 123
        %v498 = vpop.permute.xlu0 %497
        %499 = vrot.lane.b32.xlu0 %v385, 123
        %v500 = vpop.permute.xlu0 %499
        %501 = vrot.lane.b32.xlu0 %v382, 123
        %v502 = vpop.permute.xlu0 %501
        %503 = vrot.lane.b32.xlu0 %v386, 123
        %v504 = vpop.permute.xlu0 %503
        %505 = vrot.lane.b32.xlu0 %v383, 123
        %v506 = vpop.permute.xlu0 %505
        %507 = vrot.lane.b32.xlu0 %v387, 123
        %v508 = vpop.permute.xlu0 %507
        %509 = vrot.lane.b32.xlu0 %v384, 123
        %v510 = vpop.permute.xlu0 %509
        %511 = vrot.lane.b32.xlu0 %v388, 123
        %v512 = vpop.permute.xlu0 %511
        %vm513 = vcmask 1006592
        %v514 = vsel %vm513, %v498, %v500
        %v515 = vsel %vm513, %v502, %v504
        %v516 = vsel %vm513, %v506, %v508
        %v517 = vsel %vm513, %v510, %v512
        %522 = vrot.lane.b32.xlu0 %v381, 122
        %v523 = vpop.permute.xlu0 %522
        %524 = vrot.lane.b32.xlu0 %v385, 122
        %v525 = vpop.permute.xlu0 %524
        %526 = vrot.lane.b32.xlu0 %v382, 122
        %v527 = vpop.permute.xlu0 %526
        %528 = vrot.lane.b32.xlu0 %v386, 122
        %v529 = vpop.permute.xlu0 %528
        %530 = vrot.lane.b32.xlu0 %v383, 122
        %v531 = vpop.permute.xlu0 %530
        %532 = vrot.lane.b32.xlu0 %v387, 122
        %v533 = vpop.permute.xlu0 %532
        %534 = vrot.lane.b32.xlu0 %v384, 122
        %v535 = vpop.permute.xlu0 %534
        %536 = vrot.lane.b32.xlu0 %v388, 122
        %v537 = vpop.permute.xlu0 %536
        %vm538 = vcmask 998400
        %v539 = vsel %vm538, %v523, %v525
        %v540 = vsel %vm538, %v527, %v529
        %v541 = vsel %vm538, %v531, %v533
        %v542 = vsel %vm538, %v535, %v537
        %v547 = vld [vmem:[%s2] sm:$0xff]
        %v548 = vld [vmem:[%s2 + $0x8] sm:$0xff]
        %v549 = vld [vmem:[%s2 + $0x10] sm:$0xff]
        %v550 = vld [vmem:[%s2 + $0x18] sm:$0xff]
        %v551 = vld [vmem:[%s2 + $0x20] sm:$0xff]
        %v552 = vld [vmem:[%s2 + $0x28] sm:$0xff]
        %v553 = vld [vmem:[%s2 + $0x30] sm:$0xff]
        %v554 = vld [vmem:[%s2 + $0x38] sm:$0xff]
        %v555 = vld [vmem:[%s2 + $0x40] sm:$0xff]
        %v556 = vld [vmem:[%s2 + $0x48] sm:$0xff]
        %v557 = vld [vmem:[%s2 + $0x50] sm:$0xff]
        %v558 = vld [vmem:[%s2 + $0x58] sm:$0xff]
        %v559 = vld [vmem:[%s2 + $0x60] sm:$0xff]
        %v560 = vld [vmem:[%s2 + $0x68] sm:$0xff]
        %v561 = vld [vmem:[%s2 + $0x70] sm:$0xff]
        %v562 = vld [vmem:[%s2 + $0x78] sm:$0xff]
        %v563 = vld [vmem:[%s2 + $0x80] sm:$0xff]
        %v564 = vld [vmem:[%s2 + $0x88] sm:$0xff]
        %v565 = vld [vmem:[%s2 + $0x90] sm:$0xff]
        %v566 = vld [vmem:[%s2 + $0x98] sm:$0xff]
        %v567 = vld [vmem:[%s2 + $0xa0] sm:$0xff]
        %v568 = vld [vmem:[%s2 + $0xa8] sm:$0xff]
        %v569 = vld [vmem:[%s2 + $0xb0] sm:$0xff]
        %v570 = vld [vmem:[%s2 + $0xb8] sm:$0xff]
        %vm571 = vcmask 785408
        %v573 = vsel %vm571, %v548, 0
        %v576 = vsel %vm571, %v550, 0
        %v579 = vsel %vm571, %v552, 0
        %v582 = vsel %vm571, %v554, 0
        %v585 = vsel %vm571, %v556, 0
        %v588 = vsel %vm571, %v558, 0
        %v591 = vsel %vm571, %v560, 0
        %v594 = vsel %vm571, %v562, 0
        %v597 = vsel %vm571, %v564, 0
        %v600 = vsel %vm571, %v566, 0
        %v603 = vsel %vm571, %v568, 0
        %v606 = vsel %vm571, %v570, 0
        %608 = vmatprep.subr.mxu0 0.0
        %609 = vmatpush1.msra.mxu0 %v381
        %610 = vmatprep.subr.mxu0 0.0
        %611 = vmatpush1.msra.mxu0 %v382
        %612 = vmatprep.subr.mxu0 0.0
        %613 = vmatpush1.msra.mxu0 %v383
        %614 = vmatprep.subr.mxu0 0.0
        %615 = vmatpush1.msra.mxu0 %v384
        %616 = vmatprep.subr.mxu0 0.0
        %617 = vmatpush1.msra.mxu0 %v414
        %618 = vmatprep.subr.mxu0 0.0
        %619 = vmatpush1.msra.mxu0 %v415
        %620 = vmatprep.subr.mxu0 0.0
        %621 = vmatpush1.msra.mxu0 %v416
        %622 = vmatprep.subr.mxu0 0.0
        %623 = vmatpush1.msra.mxu0 %v417
        %624 = vmatprep.subr.mxu0 0.0
        %625 = vmatpush1.msra.mxu0 %v439
        %626 = vmatprep.subr.mxu0 0.0
        %627 = vmatpush1.msra.mxu0 %v440
        %628 = vmatprep.subr.mxu0 0.0
        %629 = vmatpush1.msra.mxu0 %v441
        %630 = vmatprep.subr.mxu0 0.0
        %631 = vmatpush1.msra.mxu0 %v442
        %632 = vmatprep.subr.mxu0 0.0
        %633 = vmatpush1.msra.mxu0 %v464
        %634 = vmatprep.subr.mxu0 0.0
        %635 = vmatpush1.msra.mxu0 %v465
        %636 = vmatprep.subr.mxu0 0.0
        %637 = vmatpush1.msra.mxu0 %v466
        %638 = vmatprep.subr.mxu0 0.0
        %639 = vmatpush1.msra.mxu0 %v467
        %640 = vmatprep.subr.mxu0 0.0
        %641 = vmatpush1.msra.mxu0 %v489
        %642 = vmatprep.subr.mxu0 0.0
        %643 = vmatpush1.msra.mxu0 %v490
        %644 = vmatprep.subr.mxu0 0.0
        %645 = vmatpush1.msra.mxu0 %v491
        %646 = vmatprep.subr.mxu0 0.0
        %647 = vmatpush1.msra.mxu0 %v492
        %648 = vmatprep.subr.mxu0 0.0
        %649 = vmatpush1.msra.mxu0 %v514
        %650 = vmatprep.subr.mxu0 0.0
        %651 = vmatpush1.msra.mxu0 %v515
        %652 = vmatprep.subr.mxu0 0.0
        %653 = vmatpush1.msra.mxu0 %v516
        %654 = vmatprep.subr.mxu0 0.0
        %655 = vmatpush1.msra.mxu0 %v517
        %656 = vmatprep.subr.mxu0 0.0
        %657 = vmatpush1.msra.mxu0 %v539
        %658 = vmatprep.subr.mxu0 0.0
        %659 = vmatpush1.msra.mxu0 %v540
        %660 = vmatprep.subr.mxu0 0.0
        %661 = vmatpush1.msra.mxu0 %v541
        %662 = vmatprep.subr.mxu0 0.0
        %663 = vmatpush1.msra.mxu0 %v542
        %664 = vmatprep.subr.mxu0 0.0
        %665 = vmatpush1.msra.mxu0 0.0
        %666 = vmatprep.subr.mxu0 0.0
        %667 = vmatpush1.msra.mxu0 0.0
        %668 = vmatprep.subr.mxu0 0.0
        %669 = vmatpush1.msra.mxu0 0.0
        %670 = vmatprep.subr.mxu0 0.0
        %671 = vmatpush1.msra.mxu0 0.0
        %672 = vmatprep.mubr.f32.mxu0 %v573
        %673 = vmatmul.mubr.f32.gmra.mrb[0].mxu0 %v547
        %v674 = vpop.f32.mrb[0].mxu0
        %v675 = vadd.f32 0.0, %v674
        %v676 = vpop.f32.mrb[0].mxu0
        %677 = vmatprep.mubr.f32.mxu0 %v576
        %678 = vmatmul.mubr.f32.gmra.mrb[0].mxu0 %v549
        %v679 = vpop.f32.mrb[0].mxu0
        %v680 = vadd.f32 0.0, %v679
        %v681 = vpop.f32.mrb[0].mxu0
        %682 = vmatprep.mubr.f32.mxu0 %v579
        %683 = vmatmul.mubr.f32.gmra.mrb[0].mxu0 %v551
        %v684 = vpop.f32.mrb[0].mxu0
        %v685 = vadd.f32 0.0, %v684
        %v686 = vpop.f32.mrb[0].mxu0
        %687 = vmatprep.mubr.f32.mxu0 %v582
        %688 = vmatmul.mubr.f32.gmra.mrb[0].mxu0 %v553
        %v689 = vpop.f32.mrb[0].mxu0
        %v690 = vadd.f32 0.0, %v689
        %v691 = vpop.f32.mrb[0].mxu0
        %692 = vmatprep.mubr.f32.mxu0 %v585
        %693 = vmatmul.mubr.f32.gmra.mrb[0].mxu0 %v555
        %v694 = vpop.f32.mrb[0].mxu0
        %v695 = vadd.f32 0.0, %v694
        %v696 = vpop.f32.mrb[0].mxu0
        %697 = vmatprep.mubr.f32.mxu0 %v588
        %698 = vmatmul.mubr.f32.gmra.mrb[0].mxu0 %v557
        %v699 = vpop.f32.mrb[0].mxu0
        %v700 = vadd.f32 0.0, %v699
        %v701 = vpop.f32.mrb[0].mxu0
        %702 = vmatprep.mubr.f32.mxu0 %v591
        %703 = vmatmul.mubr.f32.gmra.mrb[0].mxu0 %v559
        %v704 = vpop.f32.mrb[0].mxu0
        %v705 = vadd.f32 0.0, %v704
        %v706 = vpop.f32.mrb[0].mxu0
        %707 = vmatprep.mubr.f32.mxu0 %v594
        %708 = vmatmul.mubr.f32.gmra.mrb[0].mxu0 %v561
        %v709 = vpop.f32.mrb[0].mxu0
        %v710 = vadd.f32 0.0, %v709
        %v711 = vpop.f32.mrb[0].mxu0
        %712 = vmatprep.mubr.f32.mxu0 %v597
        %713 = vmatmul.mubr.f32.gmra.mrb[0].mxu0 %v563
        %v714 = vpop.f32.mrb[0].mxu0
        %v715 = vadd.f32 0.0, %v714
        %v716 = vpop.f32.mrb[0].mxu0
        %717 = vmatprep.mubr.f32.mxu0 %v600
        %718 = vmatmul.mubr.f32.gmra.mrb[0].mxu0 %v565
        %v719 = vpop.f32.mrb[0].mxu0
        %v720 = vadd.f32 0.0, %v719
        %v721 = vpop.f32.mrb[0].mxu0
        %722 = vmatprep.mubr.f32.mxu0 %v603
        %723 = vmatmul.mubr.f32.gmra.mrb[0].mxu0 %v567
        %v724 = vpop.f32.mrb[0].mxu0
        %v725 = vadd.f32 0.0, %v724
        %v726 = vpop.f32.mrb[0].mxu0
        %727 = vmatprep.mubr.f32.mxu0 %v606
        %728 = vmatmul.mubr.f32.gmra.mrb[0].mxu0 %v569
        %v729 = vpop.f32.mrb[0].mxu0
        %v730 = vadd.f32 0.0, %v729
        %v731 = vpop.f32.mrb[0].mxu0
        %732 = vdwg.mxu0
        %v733 = vld [vmem:[%s3] sm:$0xff]
        %v734 = vld [vmem:[%s3 + $0x8] sm:$0xff]
        %v735 = vld [vmem:[%s3 + $0x10] sm:$0xff]
        %v736 = vld [vmem:[%s3 + $0x18] sm:$0xff]
        %v737 = vld [vmem:[%s3 + $0x20] sm:$0xff]
        %v738 = vld [vmem:[%s3 + $0x28] sm:$0xff]
        %v739 = vld [vmem:[%s3 + $0x30] sm:$0xff]
        %v740 = vld [vmem:[%s3 + $0x38] sm:$0xff]
        %v741 = vld [vmem:[%s3 + $0x40] sm:$0xff]
        %v742 = vld [vmem:[%s3 + $0x48] sm:$0xff]
        %v743 = vld [vmem:[%s3 + $0x50] sm:$0xff]
        %v744 = vld [vmem:[%s3 + $0x58] sm:$0xff]
        %746 = vset.pattern.permute.xlu0 0
        %747 = vperm.xlu0 %746, %v733
        %v748 = vpop.permute.xlu0 %747
        %751 = vset.pattern.permute.xlu0 0
        %752 = vperm.xlu0 %751, %v734
        %v753 = vpop.permute.xlu0 %752
        %756 = vset.pattern.permute.xlu0 0
        %757 = vperm.xlu0 %756, %v735
        %v758 = vpop.permute.xlu0 %757
        %761 = vset.pattern.permute.xlu0 0
        %762 = vperm.xlu0 %761, %v736
        %v763 = vpop.permute.xlu0 %762
        %766 = vset.pattern.permute.xlu0 0
        %767 = vperm.xlu0 %766, %v737
        %v768 = vpop.permute.xlu0 %767
        %771 = vset.pattern.permute.xlu0 0
        %772 = vperm.xlu0 %771, %v738
        %v773 = vpop.permute.xlu0 %772
        %776 = vset.pattern.permute.xlu0 0
        %777 = vperm.xlu0 %776, %v739
        %v778 = vpop.permute.xlu0 %777
        %781 = vset.pattern.permute.xlu0 0
        %782 = vperm.xlu0 %781, %v740
        %v783 = vpop.permute.xlu0 %782
        %786 = vset.pattern.permute.xlu0 0
        %787 = vperm.xlu0 %786, %v741
        %v788 = vpop.permute.xlu0 %787
        %791 = vset.pattern.permute.xlu0 0
        %792 = vperm.xlu0 %791, %v742
        %v793 = vpop.permute.xlu0 %792
        %796 = vset.pattern.permute.xlu0 0
        %797 = vperm.xlu0 %796, %v743
        %v798 = vpop.permute.xlu0 %797
        %801 = vset.pattern.permute.xlu0 0
        %802 = vperm.xlu0 %801, %v744
        %v803 = vpop.permute.xlu0 %802
        %v805 = vmul.f32 %v675, %v748
        %v806 = vmul.f32 %v680, %v753
        %v807 = vmul.f32 %v685, %v758
        %v808 = vmul.f32 %v690, %v763
        %v809 = vmul.f32 %v695, %v768
        %v810 = vmul.f32 %v700, %v773
        %v811 = vmul.f32 %v705, %v778
        %v812 = vmul.f32 %v710, %v783
        %v813 = vmul.f32 %v715, %v788
        %v814 = vmul.f32 %v720, %v793
        %v815 = vmul.f32 %v725, %v798
        %v816 = vmul.f32 %v730, %v803
        %v817 = vld [vmem:[%s4] sm:$0xff]
        %v818 = vld [vmem:[%s4 + $0x8] sm:$0xff]
        %v819 = vld [vmem:[%s4 + $0x10] sm:$0xff]
        %v820 = vld [vmem:[%s4 + $0x18] sm:$0xff]
        %v821 = vld [vmem:[%s4 + $0x20] sm:$0xff]
        %v822 = vld [vmem:[%s4 + $0x28] sm:$0xff]
        %v823 = vld [vmem:[%s4 + $0x30] sm:$0xff]
        %v824 = vld [vmem:[%s4 + $0x38] sm:$0xff]
        %v825 = vld [vmem:[%s4 + $0x40] sm:$0xff]
        %v826 = vld [vmem:[%s4 + $0x48] sm:$0xff]
        %v827 = vld [vmem:[%s4 + $0x50] sm:$0xff]
        %v828 = vld [vmem:[%s4 + $0x58] sm:$0xff]
        %830 = vset.pattern.permute.xlu0 0
        %831 = vperm.xlu0 %830, %v817
        %v832 = vpop.permute.xlu0 %831
        %835 = vset.pattern.permute.xlu0 0
        %836 = vperm.xlu0 %835, %v818
        %v837 = vpop.permute.xlu0 %836
        %840 = vset.pattern.permute.xlu0 0
        %841 = vperm.xlu0 %840, %v819
        %v842 = vpop.permute.xlu0 %841
        %845 = vset.pattern.permute.xlu0 0
        %846 = vperm.xlu0 %845, %v820
        %v847 = vpop.permute.xlu0 %846
        %850 = vset.pattern.permute.xlu0 0
        %851 = vperm.xlu0 %850, %v821
        %v852 = vpop.permute.xlu0 %851
        %855 = vset.pattern.permute.xlu0 0
        %856 = vperm.xlu0 %855, %v822
        %v857 = vpop.permute.xlu0 %856
        %860 = vset.pattern.permute.xlu0 0
        %861 = vperm.xlu0 %860, %v823
        %v862 = vpop.permute.xlu0 %861
        %865 = vset.pattern.permute.xlu0 0
        %866 = vperm.xlu0 %865, %v824
        %v867 = vpop.permute.xlu0 %866
        %870 = vset.pattern.permute.xlu0 0
        %871 = vperm.xlu0 %870, %v825
        %v872 = vpop.permute.xlu0 %871
        %875 = vset.pattern.permute.xlu0 0
        %876 = vperm.xlu0 %875, %v826
        %v877 = vpop.permute.xlu0 %876
        %880 = vset.pattern.permute.xlu0 0
        %881 = vperm.xlu0 %880, %v827
        %v882 = vpop.permute.xlu0 %881
        %885 = vset.pattern.permute.xlu0 0
        %886 = vperm.xlu0 %885, %v828
        %v887 = vpop.permute.xlu0 %886
        %v889 = vadd.f32 %v805, %v832
        %v890 = vadd.f32 %v806, %v837
        %v891 = vadd.f32 %v807, %v842
        %v892 = vadd.f32 %v808, %v847
        %v893 = vadd.f32 %v809, %v852
        %v894 = vadd.f32 %v810, %v857
        %v895 = vadd.f32 %v811, %v862
        %v896 = vadd.f32 %v812, %v867
        %v897 = vadd.f32 %v813, %v872
        %v898 = vadd.f32 %v814, %v877
        %v899 = vadd.f32 %v815, %v882
        %v900 = vadd.f32 %v816, %v887
        %v901 = vmax.f32 %v889, 0.0
        %v902 = vmax.f32 %v890, 0.0
        %v903 = vmax.f32 %v891, 0.0
        %v904 = vmax.f32 %v892, 0.0
        %v905 = vmax.f32 %v893, 0.0
        %v906 = vmax.f32 %v894, 0.0
        %v907 = vmax.f32 %v895, 0.0
        %v908 = vmax.f32 %v896, 0.0
        %v909 = vmax.f32 %v897, 0.0
        %v910 = vmax.f32 %v898, 0.0
        %v911 = vmax.f32 %v899, 0.0
        %v912 = vmax.f32 %v900, 0.0
        %913 = vst [vmem:[%s256] sm:$0xff] %v901
        %914 = vst [vmem:[%s256 + $0x8] sm:$0xff] %v902
        %915 = vst [vmem:[%s256 + $0x10] sm:$0xff] %v903
        %916 = vst [vmem:[%s256 + $0x18] sm:$0xff] %v904
        %917 = vst [vmem:[%s256 + $0x20] sm:$0xff] %v905
        %918 = vst [vmem:[%s256 + $0x28] sm:$0xff] %v906
        %919 = vst [vmem:[%s256 + $0x30] sm:$0xff] %v907
        %920 = vst [vmem:[%s256 + $0x38] sm:$0xff] %v908
        %921 = vst [vmem:[%s256 + $0x40] sm:$0xff] %v909
        %922 = vst [vmem:[%s256 + $0x48] sm:$0xff] %v910
        %923 = vst [vmem:[%s256 + $0x50] sm:$0xff] %v911
        %924 = vst [vmem:[%s256 + $0x58] sm:$0xff] %v912
        %s925 = sand.u32 %s154, 1
        %s926 = scalar_lea.sflag [#allocation5], %s925
        %s927 = sand.u32 %s154, 1
        %s928 = smul.addr %s927, 96
        %s929 = scalar_lea.vmem [#allocation6], %s928
        // Predicated region
        $region45: #{tpu_custom_call.1} parent=39 // pred_check
          %p930 = pneg %p164
        $region46: #{tpu_custom_call.1} parent=39 // pred_check_branch
          %932 = sbr.rel (%p930) target = $region48
        $region47: #{tpu_custom_call.1} parent=39 // pred_region
          %s934 = ssub.s32 1536, 1536
          %935 = vsyncadd %s926, %s934
          %s936 = smul.addr %s26, 24
          %s937 = sadd.s32 %s27, %s936
          %s938 = smul.addr %s937, 128
          %s939 = scalar_lea.hbm %s5, %s938
          %s940 = sshll.u32 %s929, 4
          %s941 = int_to_ptr.vmem [resolvable:$true] %s940
          %946 = dma.vmem_to_hbm [thread:$0]  %s941, 1536, %s939, %s926, 128, 256, 8
        $region48: #{tpu_custom_call.1} parent=39 // pred_fallthru
          _
      $region40: #{tpu_custom_call.1} parent=5 // pred_fallthru
        _
      %p947 = scmp.le.s32.totalorder 2, %s17
      // Predicated region
      $region49: #{tpu_custom_call.1} parent=5 // pred_check
        %p948 = pneg %p947
      $region50: #{tpu_custom_call.1} parent=5 // pred_check_branch
        %950 = sbr.rel (%p948) target = $region52
      $region51: #{tpu_custom_call.1} parent=5 // pred_region
        %s951 = ssub.s32 %s17, 2
        // Predicated region
        $region53: #{tpu_custom_call.1} parent=51 // pred_check
          %p952 = pneg %p170
        $region54: #{tpu_custom_call.1} parent=51 // pred_check_branch
          %954 = sbr.rel (%p952) target = $region56
        $region55: #{tpu_custom_call.1} parent=51 // pred_region
          %s955 = sand.u32 %s155, 1
          %s956 = scalar_lea.sflag [#allocation5], %s955
          %s957 = sand.u32 %s155, 1
          %s958 = smul.addr %s957, 96
          %s959 = scalar_lea.vmem [#allocation6], %s958
          %960 = dma.done %s956, 1536
        $region56: #{tpu_custom_call.1} parent=51 // pred_fallthru
          _
      $region52: #{tpu_custom_call.1} parent=5 // pred_fallthru
        _
    $region6: #{tpu_custom_call.1} parent=1 // loop_footer
      %s21 = sadd.s32 1, %s17
    $region7: #{tpu_custom_call.1} parent=1 // loop_footer_branch
      %16 = sbr.rel target = $region3
    $region8: #{tpu_custom_call.1} parent=1 // loop_exit
      _
    %961 = vsyncpa [#allocation4], 1
    %s962 = scalar_lea.sflag [#allocation4], 1
    %963 = vsyncpa %s962, 1
    %964 = vsyncpa [#allocation5], 1
    %s965 = scalar_lea.sflag [#allocation5], 1
    %966 = vsyncpa %s965, 1

</llo_original>
